<compile_context>
chip_gen: v5e
topology: v5e:2x2
jax: 0.10.0
libtpu: 0.0.40
codegen_flags: <defaults>
</compile_context>

<pallas_src>
import functools

import jax
import jax.numpy as jnp
from jax.experimental import pallas as pl
from jax.experimental.pallas import tpu as pltpu


def _round_up(x, m):
    return (x + m - 1) // m * m


# ----------------------------------------------------------------------------
# Fused tiled matmul + per-column scale/bias + activation Pallas kernel
#   grid = (M tiles, K tiles); K is the (last, "arbitrary") reduction axis.
# ----------------------------------------------------------------------------
def _fused_matmul_kernel(x_ref, w_ref, scale_ref, bias_ref, o_ref, acc_ref, *, act):
    k = pl.program_id(1)

    @pl.when(k == 0)
    def _():
        acc_ref[...] = jnp.zeros_like(acc_ref)

    acc_ref[...] += jnp.dot(x_ref[...], w_ref[...],
                            preferred_element_type=jnp.float32)

    @pl.when(k == pl.num_programs(1) - 1)
    def _():
        y = acc_ref[...] * scale_ref[...] + bias_ref[...]   # (1, N) broadcast
        if act == "leaky_relu":
            y = jnp.where(y >= 0.0, y, 0.2 * y)
        elif act == "sigmoid":
            # EUP-friendly sigmoid (exp + approx reciprocal stay off the VPU slot)
            y = pl.reciprocal(1.0 + jnp.exp(-y), approx=True)
        o_ref[...] = y.astype(o_ref.dtype)


def fused_matmul(x, w, scale, bias, act="none"):
    """out = act((x @ w) * scale + bias); scale/bias are per-output-column."""
    M, K = x.shape
    K2, N = w.shape
    assert K == K2

    # --- tiling choices -------------------------------------------------------
    # lane-dense output: pad N up to a multiple of 128
    N_pad = _round_up(max(N, 1), 128)
    # M tile: single block for small problems, 512-row tiles otherwise
    tm = _round_up(M, 8) if M <= 1024 else 512
    M_pad = _round_up(M, tm)
    # K tile: unblocked for small K, 512 otherwise (f32 accumulator handles it)
    tk = _round_up(K, 8) if K <= 1024 else 512
    K_pad = _round_up(K, tk)

    # --- bf16 MXU operands, zero-padded to the tiled shapes ---------------------
    xp = jnp.pad(x.astype(jnp.bfloat16), ((0, M_pad - M), (0, K_pad - K)))
    wp = jnp.pad(w.astype(jnp.bfloat16), ((0, K_pad - K), (0, N_pad - N)))
    sp = jnp.pad(scale.reshape(1, N).astype(jnp.float32), ((0, 0), (0, N_pad - N)))
    bp = jnp.pad(bias.reshape(1, N).astype(jnp.float32), ((0, 0), (0, N_pad - N)))

    grid_m = M_pad // tm
    grid_k = K_pad // tk

    # explicit VMEM budget: double-buffered input/output tiles + accumulator
    vmem_bytes = (2 * (tm * tk * 2 + tk * N_pad * 2 + 2 * N_pad * 4)
                  + 2 * tm * N_pad * 4          # double-buffered f32 output tile
                  + tm * N_pad * 4)             # f32 accumulator scratch
    vmem_limit = int(min(max(2 * vmem_bytes, 8 * 1024 * 1024), 32 * 1024 * 1024))

    out = pl.pallas_call(
        functools.partial(_fused_matmul_kernel, act=act),
        out_shape=jax.ShapeDtypeStruct((M_pad, N_pad), jnp.float32),
        grid=(grid_m, grid_k),
        in_specs=[
            pl.BlockSpec((tm, tk), lambda i, k: (i, k)),
            pl.BlockSpec((tk, N_pad), lambda i, k: (k, 0)),
            pl.BlockSpec((1, N_pad), lambda i, k: (0, 0)),
            pl.BlockSpec((1, N_pad), lambda i, k: (0, 0)),
        ],
        out_specs=pl.BlockSpec((tm, N_pad), lambda i, k: (i, 0)),
        scratch_shapes=[pltpu.VMEM((tm, N_pad), jnp.float32)],
        compiler_params=pltpu.CompilerParams(
            dimension_semantics=("parallel", "arbitrary"),
            vmem_limit_bytes=vmem_limit,
        ),
    )(xp, wp, sp, bp)

    # slice off padded rows / padded output channels before anything downstream
    return out[:M, :N]


# ----------------------------------------------------------------------------
# im2col (plain-JAX data rearrangement) + conv wrapper around the kernel
# ----------------------------------------------------------------------------
def im2col(x_nhwc, k, stride, pad):
    B, H, W, C = x_nhwc.shape
    xp = jnp.pad(x_nhwc, ((0, 0), (pad, pad), (pad, pad), (0, 0)))
    Ho = (H + 2 * pad - k) // stride + 1
    Wo = (W + 2 * pad - k) // stride + 1
    patches = []
    for i in range(k):
        for j in range(k):
            patches.append(xp[:, i:i + stride * Ho:stride, j:j + stride * Wo:stride, :])
    cols = jnp.stack(patches, axis=3)                 # (B, Ho, Wo, k*k, C)
    return cols.reshape(B * Ho * Wo, k * k * C), Ho, Wo


def conv2d_fused(x_nhwc, w_oihw, scale, bias, stride, pad, act):
    """PyTorch-semantics Conv2d (weight OIHW) + folded scale/bias + activation."""
    C_out, C_in, kh, kw = w_oihw.shape
    cols, Ho, Wo = im2col(x_nhwc, kh, stride, pad)
    # reorder OIHW -> (kh, kw, C_in, C_out) to match the im2col column ordering
    w2 = jnp.transpose(w_oihw, (2, 3, 1, 0)).reshape(kh * kw * C_in, C_out)
    y = fused_matmul(cols, w2, scale, bias, act)      # (B*Ho*Wo, C_out), real channels only
    B = x_nhwc.shape[0]
    return y.reshape(B, Ho, Wo, C_out)


# ----------------------------------------------------------------------------
# Parameters (deterministic synthetic init) and forward pass
# ----------------------------------------------------------------------------
def init_params(key, in_channel, mid_channels, num_classes, proj_dim):
    params = {}
    key, k1, k2 = jax.random.split(key, 3)
    params["label_proj_w"] = 0.1 * jax.random.normal(k1, (num_classes, proj_dim), jnp.float32)
    params["label_proj_b"] = 0.1 * jax.random.normal(k2, (proj_dim,), jnp.float32)

    chans = [in_channel + proj_dim] + list(mid_channels)
    # first conv (no BN)
    key, k1, k2 = jax.random.split(key, 3)
    params["conv0_w"] = 0.1 * jax.random.normal(k1, (chans[1], chans[0], 4, 4), jnp.float32)
    params["conv0_b"] = 0.1 * jax.random.normal(k2, (chans[1],), jnp.float32)
    # middle convs (with BN)
    for i in range(len(mid_channels) - 1):
        key, k1, k2, k3, k4 = jax.random.split(key, 5)
        co, ci = mid_channels[i + 1], mid_channels[i]
        params[f"conv{i + 1}_w"] = 0.1 * jax.random.normal(k1, (co, ci, 4, 4), jnp.float32)
        params[f"conv{i + 1}_b"] = 0.1 * jax.random.normal(k2, (co,), jnp.float32)
        params[f"bn{i + 1}_gamma"] = 1.0 + 0.1 * jax.random.normal(k3, (co,), jnp.float32)
        params[f"bn{i + 1}_beta"] = 0.1 * jax.random.normal(k4, (co,), jnp.float32)
        params[f"bn{i + 1}_mean"] = jnp.zeros((co,), jnp.float32)   # running stats (eval mode)
        params[f"bn{i + 1}_var"] = jnp.ones((co,), jnp.float32)
    # final conv
    key, k1, k2 = jax.random.split(key, 3)
    params["conv_final_w"] = 0.1 * jax.random.normal(k1, (1, mid_channels[-1], 4, 4), jnp.float32)
    params["conv_final_b"] = 0.1 * jax.random.normal(k2, (1,), jnp.float32)
    return params


def conv_discriminator_forward(params, image_nchw, label, mid_channels, img_size):
    B = image_nchw.shape[0]
    proj_dim = params["label_proj_w"].shape[1]

    # label_proj = nn.Linear(num_classes, proj_dim): degenerate (B x 10) GEMM,
    # kept in plain JAX per perf feedback (a Pallas/MXU launch is pure overhead).
    emb = label.astype(jnp.float32) @ params["label_proj_w"] + params["label_proj_b"]

    # concat [image, expanded label embedding] along channel (NHWC last axis)
    img = jnp.transpose(image_nchw, (0, 2, 3, 1))                      # NCHW -> NHWC
    H, W = img.shape[1], img.shape[2]
    emb_map = jnp.broadcast_to(emb[:, None, None, :], (B, H, W, proj_dim))
    x = jnp.concatenate([img, emb_map], axis=-1)

    # layer 0: Conv2d(k4,s2,p1) + LeakyReLU(0.2)   (Pallas fused GEMM)
    c0 = mid_channels[0]
    x = conv2d_fused(x, params["conv0_w"], jnp.ones((c0,), jnp.float32),
                     params["conv0_b"], stride=2, pad=1, act="leaky_relu")

    # middle layers: Conv2d(k4,s2,p1) + BatchNorm2d (eval) + LeakyReLU(0.2)
    for i in range(len(mid_channels) - 1):
        gamma = params[f"bn{i + 1}_gamma"]
        beta = params[f"bn{i + 1}_beta"]
        mean = params[f"bn{i + 1}_mean"]
        var = params[f"bn{i + 1}_var"]
        bn_scale = gamma / jnp.sqrt(var + 1e-5)
        eff_bias = beta + (params[f"conv{i + 1}_b"] - mean) * bn_scale
        x = conv2d_fused(x, params[f"conv{i + 1}_w"], bn_scale, eff_bias,
                         stride=2, pad=1, act="leaky_relu")

    # final layer: Conv2d(mid[-1] -> 1) + Sigmoid.  N=1 degenerate GEMM: plain
    # JAX per perf feedback (a Pallas launch would be a fully-masked store).
    if img_size == 28:
        stride, pad = 2, 1
    else:
        stride, pad = 1, 0
    wf = params["conv_final_w"]
    cols, Ho, Wo = im2col(x, wf.shape[2], stride, pad)
    w2 = jnp.transpose(wf, (2, 3, 1, 0)).reshape(-1, 1)
    y = jax.nn.sigmoid(cols @ w2 + params["conv_final_b"])             # (B*Ho*Wo, 1)

    return y.reshape(-1, 1)                                            # x.view(-1, 1)


# ----------------------------------------------------------------------------
if __name__ == "__main__":
    # small config consistent with the module
    in_channel = 3
    mid_channels = [8, 16]
    num_classes = 10
    proj_dim = 8
    img_size = 16          # 16 -> 8 -> 4 -> 1 spatially
    batch = 2

    key = jax.random.PRNGKey(0)
    key, k_img, k_lbl, k_par = jax.random.split(key, 4)

    image = jax.random.normal(k_img, (batch, in_channel, img_size, img_size), jnp.float32)
    label_idx = jax.random.randint(k_lbl, (batch,), 0, num_classes)
    label = jax.nn.one_hot(label_idx, num_classes, dtype=jnp.float32)

    params = init_params(k_par, in_channel, mid_channels, num_classes, proj_dim)

    out = conv_discriminator_forward(params, image, label, mid_channels, img_size)
    out = jax.block_until_ready(out)

    assert out.shape == (batch, 1), out.shape
    assert bool(jnp.all((out >= 0.0) & (out <= 1.0)))  # sigmoid output range
    print("KERNEL_OK")
</pallas_src>

<mosaic_0001>
module attributes {stable_mosaic.version = 11 : i64} {
  func.func @_fused_matmul_kernel(%arg0: i32, %arg1: i32, %arg2: memref<128x176xbf16, #tpu.memory_space<vmem>>, %arg3: memref<176x128xbf16, #tpu.memory_space<vmem>>, %arg4: memref<1x128xf32, #tpu.memory_space<vmem>>, %arg5: memref<1x128xf32, #tpu.memory_space<vmem>>, %arg6: memref<128x128xf32, #tpu.memory_space<vmem>>, %arg7: memref<128x128xf32, #tpu.memory_space<vmem>>) attributes {dimension_semantics = [#tpu.dimension_semantics<parallel>, #tpu.dimension_semantics<arbitrary>], iteration_bounds = array<i64: 1, 1>, scalar_prefetch = 0 : i64, scratch_operands = 1 : i64, tpu.core_type = #tpu.core_type<tc>, window_params = [{transform_indices = @transform_0, window_bounds = array<i64: 128, 176>}, {transform_indices = @transform_1, window_bounds = array<i64: 176, 128>}, {pipeline_mode = #tpu.pipeline_mode<synchronous>, transform_indices = @transform_2, window_bounds = array<i64: 1, 128>}, {pipeline_mode = #tpu.pipeline_mode<synchronous>, transform_indices = @transform_3, window_bounds = array<i64: 1, 128>}, {transform_indices = @transform_4, window_bounds = array<i64: 128, 128>}]} {
    %c0_i32 = arith.constant 0 : i32
    %0 = arith.cmpi eq, %arg1, %c0_i32 : i32
    %1 = arith.extui %0 : i1 to i32
    %c0_i32_0 = arith.constant 0 : i32
    %2 = arith.cmpi ne, %1, %c0_i32_0 : i32
    scf.if %2 {
      %cst_10 = arith.constant 0.000000e+00 : f32
      %12 = vector.broadcast %cst_10 : f32 to vector<128x128xf32>
      %c0_11 = arith.constant 0 : index
      %c0_12 = arith.constant 0 : index
      %13 = vector.load %arg7[%c0_11, %c0_12] : memref<128x128xf32, #tpu.memory_space<vmem>>, vector<128x128xf32>
      tpu.vector_store %arg7[%c0_11, %c0_12], %12 {strides = array<i32>} : memref<128x128xf32, #tpu.memory_space<vmem>>, vector<128x128xf32>,
    } else {
    }
    %c0 = arith.constant 0 : index
    %c0_1 = arith.constant 0 : index
    %3 = vector.load %arg7[%c0, %c0_1] : memref<128x128xf32, #tpu.memory_space<vmem>>, vector<128x128xf32>
    %c0_2 = arith.constant 0 : index
    %c0_3 = arith.constant 0 : index
    %4 = vector.load %arg2[%c0_2, %c0_3] : memref<128x176xbf16, #tpu.memory_space<vmem>>, vector<128x176xbf16>
    %c0_4 = arith.constant 0 : index
    %c0_5 = arith.constant 0 : index
    %5 = vector.load %arg3[%c0_4, %c0_5] : memref<176x128xbf16, #tpu.memory_space<vmem>>, vector<176x128xbf16>
    %cst = arith.constant dense<0.000000e+00> : vector<128x128xf32>
    %6 = tpu.matmul %4, %5, %cst {dimension_numbers = #tpu.dot_dimension_numbers<[1], [0], [0], [1], [0, 0, 1, 1], [], []>} : vector<128x176xbf16>, vector<176x128xbf16>, vector<128x128xf32> -> vector<128x128xf32>
    %7 = arith.addf %3, %6 : vector<128x128xf32>
    %c0_6 = arith.constant 0 : index
    %c0_7 = arith.constant 0 : index
    %8 = vector.load %arg7[%c0_6, %c0_7] : memref<128x128xf32, #tpu.memory_space<vmem>>, vector<128x128xf32>
    tpu.vector_store %arg7[%c0_6, %c0_7], %7 {strides = array<i32>} : memref<128x128xf32, #tpu.memory_space<vmem>>, vector<128x128xf32>,
    %c0_i32_8 = arith.constant 0 : i32
    %9 = arith.cmpi eq, %arg1, %c0_i32_8 : i32
    %10 = arith.extui %9 : i1 to i32
    %c0_i32_9 = arith.constant 0 : i32
    %11 = arith.cmpi ne, %10, %c0_i32_9 : i32
    scf.if %11 {
      %c0_10 = arith.constant 0 : index
      %c0_11 = arith.constant 0 : index
      %12 = vector.load %arg7[%c0_10, %c0_11] : memref<128x128xf32, #tpu.memory_space<vmem>>, vector<128x128xf32>
      %c0_12 = arith.constant 0 : index
      %c0_13 = arith.constant 0 : index
      %13 = vector.load %arg4[%c0_12, %c0_13] : memref<1x128xf32, #tpu.memory_space<vmem>>, vector<1x128xf32>
      %14 = vector.broadcast %13 : vector<1x128xf32> to vector<128x128xf32>
      %15 = arith.mulf %12, %14 : vector<128x128xf32>
      %c0_14 = arith.constant 0 : index
      %c0_15 = arith.constant 0 : index
      %16 = vector.load %arg5[%c0_14, %c0_15] : memref<1x128xf32, #tpu.memory_space<vmem>>, vector<1x128xf32>
      %17 = vector.broadcast %16 : vector<1x128xf32> to vector<128x128xf32>
      %18 = arith.addf %15, %17 : vector<128x128xf32>
      %cst_16 = arith.constant 0.000000e+00 : f32
      %19 = vector.broadcast %cst_16 : f32 to vector<128x128xf32>
      %20 = arith.cmpf oge, %18, %19 : vector<128x128xf32>
      %cst_17 = arith.constant 2.000000e-01 : f32
      %21 = vector.broadcast %cst_17 : f32 to vector<128x128xf32>
      %22 = arith.mulf %21, %18 : vector<128x128xf32>
      %23 = arith.select %20, %18, %22 : vector<128x128xi1>, vector<128x128xf32>
      %c0_18 = arith.constant 0 : index
      %c0_19 = arith.constant 0 : index
      %24 = vector.load %arg6[%c0_18, %c0_19] : memref<128x128xf32, #tpu.memory_space<vmem>>, vector<128x128xf32>
      tpu.vector_store %arg6[%c0_18, %c0_19], %23 {strides = array<i32>} : memref<128x128xf32, #tpu.memory_space<vmem>>, vector<128x128xf32>,
    } else {
    }
    return
  }
  func.func @transform_0(%arg0: i32, %arg1: i32) -> (i32, i32) {
    %c0_i32 = arith.constant 0 : i32
    return %arg0, %arg1 : i32, i32
  }
  func.func @transform_1(%arg0: i32, %arg1: i32) -> (i32, i32) {
    %c0_i32 = arith.constant 0 : i32
    %c0_i32_0 = arith.constant 0 : i32
    return %arg1, %c0_i32 : i32, i32
  }
  func.func @transform_2(%arg0: i32, %arg1: i32) -> (i32, i32) {
    %c0_i32 = arith.constant 0 : i32
    %c0_i32_0 = arith.constant 0 : i32
    %c0_i32_1 = arith.constant 0 : i32
    return %c0_i32, %c0_i32_0 : i32, i32
  }
  func.func @transform_3(%arg0: i32, %arg1: i32) -> (i32, i32) {
    %c0_i32 = arith.constant 0 : i32
    %c0_i32_0 = arith.constant 0 : i32
    %c0_i32_1 = arith.constant 0 : i32
    return %c0_i32, %c0_i32_0 : i32, i32
  }
  func.func @transform_4(%arg0: i32, %arg1: i32) -> (i32, i32) {
    %c0_i32 = arith.constant 0 : i32
    %c0_i32_0 = arith.constant 0 : i32
    return %arg0, %c0_i32 : i32, i32
  }
}

</mosaic_0001>

<llo_original>
// kernel: tpu_custom_call.1
$region0: #{tpu_custom_call.1}
  #allocation0 [shape = 'u32[]', space=smem, size = 0x4, offset = 0x4, fixed_abs, tag = 'smem constant byte address 0x4 - core index']
  #allocation1 [shape = 'u32[72,128]{1,0:T(1,128)}', space=vmem, size = 0x9000, scoped, tag = 'internal scratch']
  #allocation2 [shape = 'f32[128,128]{1,0:T(8,128)}', space=vmem, size = 0x10000, scoped, tag = 'scratch operand']
  %s0 = inlined_call_operand.vmem [shape: bf16[128,176], index: 0, kind: input, shape index: {}]
  %s1 = inlined_call_operand.vmem [shape: bf16[176,128], index: 1, kind: input, shape index: {}]
  %s2 = inlined_call_operand.vmem [shape: f32[1,128], index: 2, kind: input, shape index: {}]
  %s3 = inlined_call_operand.vmem [shape: f32[1,128], index: 3, kind: input, shape index: {}]
  %s4 = inlined_call_operand.hbm [shape: f32[128,128], index: 4, kind: output, shape index: {}]
  %s5 = sld [smem:[#allocation0]]
  $region34: #{tpu_custom_call.1} parent=0
    _
  %s7 = ssub.s32 1, %s5
  %s8 = scalar_select 0, %s7, %s5
  $region1: #{tpu_custom_call.1} parent=0
    #allocation3 [shape = 'u8[65536]{0}', space=vmem, size = 0x10000, scoped, tag = 'output window, operand 0, single buffered']
    #allocation4 [shape = 's32[1]{0}', space=sflag, size = 0x4, scoped, tag = 'scoped memory for tpu_custom_call.1']
    %9 = vsyncpa [#allocation4], 0
    // Predicated region
    $region2: #{tpu_custom_call.1} parent=1 // pred_check
      _
    $region3: #{tpu_custom_call.1} parent=1 // pred_check_branch
      %11 = sbr.rel (0) target = $region5
    $region4: #{tpu_custom_call.1} parent=1 // pred_region
      _
    $region5: #{tpu_custom_call.1} parent=1 // pred_fallthru
      _
    // Predicated region
    $region6: #{tpu_custom_call.1} parent=1 // pred_check
      _
    $region7: #{tpu_custom_call.1} parent=1 // pred_check_branch
      %13 = sbr.rel (0) target = $region9
    $region8: #{tpu_custom_call.1} parent=1 // pred_region
      _
    $region9: #{tpu_custom_call.1} parent=1 // pred_fallthru
      _
    // Predicated region
    $region10: #{tpu_custom_call.1} parent=1 // pred_check
      _
    $region11: #{tpu_custom_call.1} parent=1 // pred_check_branch
      %15 = sbr.rel (0) target = $region13
    $region12: #{tpu_custom_call.1} parent=1 // pred_region
      _
    $region13: #{tpu_custom_call.1} parent=1 // pred_fallthru
      _
    // Predicated region
    $region14: #{tpu_custom_call.1} parent=1 // pred_check
      _
    $region15: #{tpu_custom_call.1} parent=1 // pred_check_branch
      %17 = sbr.rel (0) target = $region17
    $region16: #{tpu_custom_call.1} parent=1 // pred_region
      _
    $region17: #{tpu_custom_call.1} parent=1 // pred_fallthru
      _
    %p19 = scmp.eq.s32.totalorder 0, 0
    // Predicated region
    $region18: #{tpu_custom_call.1} parent=1 // pred_check
      %p20 = pneg %p19
    $region19: #{tpu_custom_call.1} parent=1 // pred_check_branch
      %22 = sbr.rel (%p20) target = $region21
    $region20: #{tpu_custom_call.1} parent=1 // pred_region
      %23 = vst [vmem:[#allocation2] sm:$0xff] 0.0
      %24 = vst [vmem:[#allocation2 + $0x8] sm:$0xff] 0.0
      %25 = vst [vmem:[#allocation2 + $0x10] sm:$0xff] 0.0
      %26 = vst [vmem:[#allocation2 + $0x18] sm:$0xff] 0.0
      %27 = vst [vmem:[#allocation2 + $0x20] sm:$0xff] 0.0
      %28 = vst [vmem:[#allocation2 + $0x28] sm:$0xff] 0.0
      %29 = vst [vmem:[#allocation2 + $0x30] sm:$0xff] 0.0
      %30 = vst [vmem:[#allocation2 + $0x38] sm:$0xff] 0.0
      %31 = vst [vmem:[#allocation2 + $0x40] sm:$0xff] 0.0
      %32 = vst [vmem:[#allocation2 + $0x48] sm:$0xff] 0.0
      %33 = vst [vmem:[#allocation2 + $0x50] sm:$0xff] 0.0
      %34 = vst [vmem:[#allocation2 + $0x58] sm:$0xff] 0.0
      %35 = vst [vmem:[#allocation2 + $0x60] sm:$0xff] 0.0
      %36 = vst [vmem:[#allocation2 + $0x68] sm:$0xff] 0.0
      %37 = vst [vmem:[#allocation2 + $0x70] sm:$0xff] 0.0
      %38 = vst [vmem:[#allocation2 + $0x78] sm:$0xff] 0.0
    $region21: #{tpu_custom_call.1} parent=1 // pred_fallthru
      _
    %v39 = vld [vmem:[#allocation2] sm:$0xff]
    %v40 = vld [vmem:[#allocation2 + $0x8] sm:$0xff]
    %v41 = vld [vmem:[#allocation2 + $0x10] sm:$0xff]
    %v42 = vld [vmem:[#allocation2 + $0x18] sm:$0xff]
    %v43 = vld [vmem:[#allocation2 + $0x20] sm:$0xff]
    %v44 = vld [vmem:[#allocation2 + $0x28] sm:$0xff]
    %v45 = vld [vmem:[#allocation2 + $0x30] sm:$0xff]
    %v46 = vld [vmem:[#allocation2 + $0x38] sm:$0xff]
    %v47 = vld [vmem:[#allocation2 + $0x40] sm:$0xff]
    %v48 = vld [vmem:[#allocation2 + $0x48] sm:$0xff]
    %v49 = vld [vmem:[#allocation2 + $0x50] sm:$0xff]
    %v50 = vld [vmem:[#allocation2 + $0x58] sm:$0xff]
    %v51 = vld [vmem:[#allocation2 + $0x60] sm:$0xff]
    %v52 = vld [vmem:[#allocation2 + $0x68] sm:$0xff]
    %v53 = vld [vmem:[#allocation2 + $0x70] sm:$0xff]
    %v54 = vld [vmem:[#allocation2 + $0x78] sm:$0xff]
    %v55 = vld [vmem:[%s0] sm:$0xff]
    %v56 = vld [vmem:[%s0 + $0x8] sm:$0xff]
    %v57 = vld [vmem:[%s0 + $0x10] sm:$0xff]
    %v58 = vld [vmem:[%s0 + $0x18] sm:$0xff]
    %v59 = vld [vmem:[%s0 + $0x20] sm:$0xff]
    %v60 = vld [vmem:[%s0 + $0x28] sm:$0xff]
    %v61 = vld [vmem:[%s0 + $0x30] sm:$0xff]
    %v62 = vld [vmem:[%s0 + $0x38] sm:$0xff]
    %v63 = vld [vmem:[%s0 + $0x40] sm:$0xff]
    %v64 = vld [vmem:[%s0 + $0x48] sm:$0xff]
    %v65 = vld [vmem:[%s0 + $0x50] sm:$0xff]
    %v66 = vld [vmem:[%s0 + $0x58] sm:$0xff]
    %v67 = vld [vmem:[%s0 + $0x60] sm:$0xff]
    %v68 = vld [vmem:[%s0 + $0x68] sm:$0xff]
    %v69 = vld [vmem:[%s0 + $0x70] sm:$0xff]
    %v70 = vld [vmem:[%s0 + $0x78] sm:$0xff]
    %v71 = vld [vmem:[%s1] sm:$0xf]
    %v72 = vld [vmem:[%s1 + $0x4] sm:$0xf]
    %v73 = vld [vmem:[%s1 + $0x8] sm:$0xf]
    %v74 = vld [vmem:[%s1 + $0xc] sm:$0xf]
    %v75 = vld [vmem:[%s1 + $0x10] sm:$0xf]
    %v76 = vld [vmem:[%s1 + $0x14] sm:$0xf]
    %v77 = vld [vmem:[%s1 + $0x18] sm:$0xf]
    %v78 = vld [vmem:[%s1 + $0x1c] sm:$0xf]
    %v79 = vld [vmem:[%s1 + $0x20] sm:$0xf]
    %v80 = vld [vmem:[%s1 + $0x24] sm:$0xf]
    %v81 = vld [vmem:[%s1 + $0x28] sm:$0xf]
    %v82 = vld [vmem:[%s1 + $0x2c] sm:$0xf]
    %v83 = vld [vmem:[%s1 + $0x30] sm:$0xf]
    %v84 = vld [vmem:[%s1 + $0x34] sm:$0xf]
    %v85 = vld [vmem:[%s1 + $0x38] sm:$0xf]
    %v86 = vld [vmem:[%s1 + $0x3c] sm:$0xf]
    %v87 = vld [vmem:[%s1 + $0x40] sm:$0xf]
    %v88 = vld [vmem:[%s1 + $0x44] sm:$0xf]
    %v89 = vld [vmem:[%s1 + $0x48] sm:$0xf]
    %v90 = vld [vmem:[%s1 + $0x4c] sm:$0xf]
    %v91 = vld [vmem:[%s1 + $0x50] sm:$0xf]
    %v92 = vld [vmem:[%s1 + $0x54] sm:$0xf]
    %v109 = vunpack.c.l.b16 %v55
    %v110 = vunpack.c.h.b16 %v55
    %v111 = vunpack.c.l.b16 %v56
    %v112 = vunpack.c.h.b16 %v56
    %v113 = vunpack.c.l.b16 %v57
    %v114 = vunpack.c.h.b16 %v57
    %v115 = vunpack.c.l.b16 %v58
    %v116 = vunpack.c.h.b16 %v58
    %v117 = vunpack.c.l.b16 %v59
    %v118 = vunpack.c.h.b16 %v59
    %v119 = vunpack.c.l.b16 %v60
    %v120 = vunpack.c.h.b16 %v60
    %v121 = vunpack.c.l.b16 %v61
    %v122 = vunpack.c.h.b16 %v61
    %v123 = vunpack.c.l.b16 %v62
    %v124 = vunpack.c.h.b16 %v62
    %v125 = vunpack.c.l.b16 %v63
    %v126 = vunpack.c.h.b16 %v63
    %v127 = vunpack.c.l.b16 %v64
    %v128 = vunpack.c.h.b16 %v64
    %v129 = vunpack.c.l.b16 %v65
    %v130 = vunpack.c.h.b16 %v65
    %v131 = vunpack.c.l.b16 %v66
    %v132 = vunpack.c.h.b16 %v66
    %v133 = vunpack.c.l.b16 %v67
    %v134 = vunpack.c.h.b16 %v67
    %v135 = vunpack.c.l.b16 %v68
    %v136 = vunpack.c.h.b16 %v68
    %v137 = vunpack.c.l.b16 %v69
    %v138 = vunpack.c.h.b16 %v69
    %v139 = vunpack.c.l.b16 %v70
    %v140 = vunpack.c.h.b16 %v70
    %v141 = vpack.c.b16 %v111, %v109
    %v142 = vpack.c.b16 %v112, %v110
    %v143 = vpack.c.b16 %v115, %v113
    %v144 = vpack.c.b16 %v116, %v114
    %v145 = vpack.c.b16 %v119, %v117
    %v146 = vpack.c.b16 %v120, %v118
    %v147 = vpack.c.b16 %v123, %v121
    %v148 = vpack.c.b16 %v124, %v122
    %v149 = vpack.c.b16 %v127, %v125
    %v150 = vpack.c.b16 %v128, %v126
    %v151 = vpack.c.b16 %v131, %v129
    %v152 = vpack.c.b16 %v132, %v130
    %v153 = vpack.c.b16 %v135, %v133
    %v154 = vpack.c.b16 %v136, %v134
    %v155 = vpack.c.b16 %v139, %v137
    %v156 = vpack.c.b16 %v140, %v138
    %v187 = vunpack.c.l.b16 %v71
    %v188 = vunpack.c.l.b16 %v72
    %v189 = vunpack.c.l.b16 %v73
    %v190 = vunpack.c.l.b16 %v74
    %v191 = vunpack.c.l.b16 %v75
    %v192 = vunpack.c.l.b16 %v76
    %v193 = vunpack.c.l.b16 %v77
    %v194 = vunpack.c.l.b16 %v78
    %v195 = vunpack.c.l.b16 %v79
    %v196 = vunpack.c.l.b16 %v80
    %v197 = vunpack.c.l.b16 %v81
    %v198 = vunpack.c.l.b16 %v82
    %v199 = vunpack.c.l.b16 %v83
    %v200 = vunpack.c.l.b16 %v84
    %v201 = vunpack.c.l.b16 %v85
    %v202 = vunpack.c.l.b16 %v86
    %v203 = vunpack.c.l.b16 %v87
    %v204 = vunpack.c.l.b16 %v88
    %v205 = vunpack.c.l.b16 %v89
    %v206 = vunpack.c.l.b16 %v90
    %v207 = vunpack.c.l.b16 %v91
    %v208 = vunpack.c.l.b16 %v92
    %v209 = vpack.c.b16 %v188, %v187
    %v210 = vpack.c.b16 %v190, %v189
    %v211 = vpack.c.b16 %v192, %v191
    %v212 = vpack.c.b16 %v194, %v193
    %v213 = vpack.c.b16 %v196, %v195
    %v214 = vpack.c.b16 %v198, %v197
    %v215 = vpack.c.b16 %v200, %v199
    %v216 = vpack.c.b16 %v202, %v201
    %v217 = vpack.c.b16 %v204, %v203
    %v218 = vpack.c.b16 %v206, %v205
    %v219 = vpack.c.b16 %v208, %v207
    %vm231 = vcmask 392192
    %v233 = vsel %vm231, %v142, 0
    %v236 = vsel %vm231, %v144, 0
    %v239 = vsel %vm231, %v146, 0
    %v242 = vsel %vm231, %v148, 0
    %v245 = vsel %vm231, %v150, 0
    %v248 = vsel %vm231, %v152, 0
    %v251 = vsel %vm231, %v154, 0
    %v254 = vsel %vm231, %v156, 0
    %256 = vmatpush.bf16.msra.mxu0 %v216
    %257 = vmatpush.bf16.msra.mxu0 %v215
    %258 = vmatpush.bf16.msra.mxu0 %v214
    %259 = vmatpush.bf16.msra.mxu0 %v213
    %260 = vmatpush.bf16.msra.mxu0 %v212
    %261 = vmatpush.bf16.msra.mxu0 %v211
    %262 = vmatpush.bf16.msra.mxu0 %v210
    %263 = vmatpush.bf16.msra.mxu0 %v209
    %264 = vmatmul.bf16.gmra.mxu0 %v141
    %v265 = vpop.f32.mrf.mxu0
    %v266 = vadd.f32 0.0, %v265
    %v267 = vpop.f32.mrf.mxu0
    %v268 = vadd.f32 0.0, %v267
    %269 = vmatmul.bf16.gmra.mxu0 %v143
    %v270 = vpop.f32.mrf.mxu0
    %v271 = vadd.f32 0.0, %v270
    %v272 = vpop.f32.mrf.mxu0
    %v273 = vadd.f32 0.0, %v272
    %274 = vmatmul.bf16.gmra.mxu0 %v145
    %v275 = vpop.f32.mrf.mxu0
    %v276 = vadd.f32 0.0, %v275
    %v277 = vpop.f32.mrf.mxu0
    %v278 = vadd.f32 0.0, %v277
    %279 = vmatmul.bf16.gmra.mxu0 %v147
    %v280 = vpop.f32.mrf.mxu0
    %v281 = vadd.f32 0.0, %v280
    %v282 = vpop.f32.mrf.mxu0
    %v283 = vadd.f32 0.0, %v282
    %284 = vmatmul.bf16.gmra.mxu0 %v149
    %v285 = vpop.f32.mrf.mxu0
    %v286 = vadd.f32 0.0, %v285
    %v287 = vpop.f32.mrf.mxu0
    %v288 = vadd.f32 0.0, %v287
    %289 = vmatmul.bf16.gmra.mxu0 %v151
    %v290 = vpop.f32.mrf.mxu0
    %v291 = vadd.f32 0.0, %v290
    %v292 = vpop.f32.mrf.mxu0
    %v293 = vadd.f32 0.0, %v292
    %294 = vmatmul.bf16.gmra.mxu0 %v153
    %v295 = vpop.f32.mrf.mxu0
    %v296 = vadd.f32 0.0, %v295
    %v297 = vpop.f32.mrf.mxu0
    %v298 = vadd.f32 0.0, %v297
    %299 = vmatmul.bf16.gmra.mxu0 %v155
    %v300 = vpop.f32.mrf.mxu0
    %v301 = vadd.f32 0.0, %v300
    %v302 = vpop.f32.mrf.mxu0
    %v303 = vadd.f32 0.0, %v302
    %304 = vdwg.mxu0
    %305 = vmatpush.bf16.msra.mxu0 0
    %306 = vmatpush.bf16.msra.mxu0 0
    %307 = vmatpush.bf16.msra.mxu0 0
    %308 = vmatpush.bf16.msra.mxu0 0
    %309 = vmatpush.bf16.msra.mxu0 0
    %310 = vmatpush.bf16.msra.mxu0 %v219
    %311 = vmatpush.bf16.msra.mxu0 %v218
    %312 = vmatpush.bf16.msra.mxu0 %v217
    %313 = vmatmul.bf16.gmra.mxu0 %v233
    %v314 = vpop.f32.mrf.mxu0
    %v315 = vadd.f32 %v266, %v314
    %v316 = vpop.f32.mrf.mxu0
    %v317 = vadd.f32 %v268, %v316
    %318 = vmatmul.bf16.gmra.mxu0 %v236
    %v319 = vpop.f32.mrf.mxu0
    %v320 = vadd.f32 %v271, %v319
    %v321 = vpop.f32.mrf.mxu0
    %v322 = vadd.f32 %v273, %v321
    %323 = vmatmul.bf16.gmra.mxu0 %v239
    %v324 = vpop.f32.mrf.mxu0
    %v325 = vadd.f32 %v276, %v324
    %v326 = vpop.f32.mrf.mxu0
    %v327 = vadd.f32 %v278, %v326
    %328 = vmatmul.bf16.gmra.mxu0 %v242
    %v329 = vpop.f32.mrf.mxu0
    %v330 = vadd.f32 %v281, %v329
    %v331 = vpop.f32.mrf.mxu0
    %v332 = vadd.f32 %v283, %v331
    %333 = vmatmul.bf16.gmra.mxu0 %v245
    %v334 = vpop.f32.mrf.mxu0
    %v335 = vadd.f32 %v286, %v334
    %v336 = vpop.f32.mrf.mxu0
    %v337 = vadd.f32 %v288, %v336
    %338 = vmatmul.bf16.gmra.mxu0 %v248
    %v339 = vpop.f32.mrf.mxu0
    %v340 = vadd.f32 %v291, %v339
    %v341 = vpop.f32.mrf.mxu0
    %v342 = vadd.f32 %v293, %v341
    %343 = vmatmul.bf16.gmra.mxu0 %v251
    %v344 = vpop.f32.mrf.mxu0
    %v345 = vadd.f32 %v296, %v344
    %v346 = vpop.f32.mrf.mxu0
    %v347 = vadd.f32 %v298, %v346
    %348 = vmatmul.bf16.gmra.mxu0 %v254
    %v349 = vpop.f32.mrf.mxu0
    %v350 = vadd.f32 %v301, %v349
    %v351 = vpop.f32.mrf.mxu0
    %v352 = vadd.f32 %v303, %v351
    %353 = vdwg.mxu0
    %v354 = vadd.f32 %v39, %v315
    %v355 = vadd.f32 %v40, %v317
    %v356 = vadd.f32 %v41, %v320
    %v357 = vadd.f32 %v42, %v322
    %v358 = vadd.f32 %v43, %v325
    %v359 = vadd.f32 %v44, %v327
    %v360 = vadd.f32 %v45, %v330
    %v361 = vadd.f32 %v46, %v332
    %v362 = vadd.f32 %v47, %v335
    %v363 = vadd.f32 %v48, %v337
    %v364 = vadd.f32 %v49, %v340
    %v365 = vadd.f32 %v50, %v342
    %v366 = vadd.f32 %v51, %v345
    %v367 = vadd.f32 %v52, %v347
    %v368 = vadd.f32 %v53, %v350
    %v369 = vadd.f32 %v54, %v352
    %370 = vst [vmem:[#allocation2] sm:$0xff] %v354
    %371 = vst [vmem:[#allocation2 + $0x8] sm:$0xff] %v355
    %372 = vst [vmem:[#allocation2 + $0x10] sm:$0xff] %v356
    %373 = vst [vmem:[#allocation2 + $0x18] sm:$0xff] %v357
    %374 = vst [vmem:[#allocation2 + $0x20] sm:$0xff] %v358
    %375 = vst [vmem:[#allocation2 + $0x28] sm:$0xff] %v359
    %376 = vst [vmem:[#allocation2 + $0x30] sm:$0xff] %v360
    %377 = vst [vmem:[#allocation2 + $0x38] sm:$0xff] %v361
    %378 = vst [vmem:[#allocation2 + $0x40] sm:$0xff] %v362
    %379 = vst [vmem:[#allocation2 + $0x48] sm:$0xff] %v363
    %380 = vst [vmem:[#allocation2 + $0x50] sm:$0xff] %v364
    %381 = vst [vmem:[#allocation2 + $0x58] sm:$0xff] %v365
    %382 = vst [vmem:[#allocation2 + $0x60] sm:$0xff] %v366
    %383 = vst [vmem:[#allocation2 + $0x68] sm:$0xff] %v367
    %384 = vst [vmem:[#allocation2 + $0x70] sm:$0xff] %v368
    %385 = vst [vmem:[#allocation2 + $0x78] sm:$0xff] %v369
    // Predicated region
    $region22: #{tpu_custom_call.1} parent=1 // pred_check
      %p386 = pneg %p19
    $region23: #{tpu_custom_call.1} parent=1 // pred_check_branch
      %388 = sbr.rel (%p386) target = $region25
    $region24: #{tpu_custom_call.1} parent=1 // pred_region
      %v389 = vld [vmem:[#allocation2] sm:$0xff]
      %v390 = vld [vmem:[#allocation2 + $0x8] sm:$0xff]
      %v391 = vld [vmem:[#allocation2 + $0x10] sm:$0xff]
      %v392 = vld [vmem:[#allocation2 + $0x18] sm:$0xff]
      %v393 = vld [vmem:[#allocation2 + $0x20] sm:$0xff]
      %v394 = vld [vmem:[#allocation2 + $0x28] sm:$0xff]
      %v395 = vld [vmem:[#allocation2 + $0x30] sm:$0xff]
      %v396 = vld [vmem:[#allocation2 + $0x38] sm:$0xff]
      %v397 = vld [vmem:[#allocation2 + $0x40] sm:$0xff]
      %v398 = vld [vmem:[#allocation2 + $0x48] sm:$0xff]
      %v399 = vld [vmem:[#allocation2 + $0x50] sm:$0xff]
      %v400 = vld [vmem:[#allocation2 + $0x58] sm:$0xff]
      %v401 = vld [vmem:[#allocation2 + $0x60] sm:$0xff]
      %v402 = vld [vmem:[#allocation2 + $0x68] sm:$0xff]
      %v403 = vld [vmem:[#allocation2 + $0x70] sm:$0xff]
      %v404 = vld [vmem:[#allocation2 + $0x78] sm:$0xff]
      %v405 = vld [vmem:[%s2] sm:$0x1]
      %v407 = vperm.slane %v405, 0
      %v409 = vmul.f32 %v389, %v407
      %v410 = vmul.f32 %v390, %v407
      %v411 = vmul.f32 %v391, %v407
      %v412 = vmul.f32 %v392, %v407
      %v413 = vmul.f32 %v393, %v407
      %v414 = vmul.f32 %v394, %v407
      %v415 = vmul.f32 %v395, %v407
      %v416 = vmul.f32 %v396, %v407
      %v417 = vmul.f32 %v397, %v407
      %v418 = vmul.f32 %v398, %v407
      %v419 = vmul.f32 %v399, %v407
      %v420 = vmul.f32 %v400, %v407
      %v421 = vmul.f32 %v401, %v407
      %v422 = vmul.f32 %v402, %v407
      %v423 = vmul.f32 %v403, %v407
      %v424 = vmul.f32 %v404, %v407
      %v425 = vld [vmem:[%s3] sm:$0x1]
      %v427 = vperm.slane %v425, 0
      %v429 = vadd.f32 %v409, %v427
      %v430 = vadd.f32 %v410, %v427
      %v431 = vadd.f32 %v411, %v427
      %v432 = vadd.f32 %v412, %v427
      %v433 = vadd.f32 %v413, %v427
      %v434 = vadd.f32 %v414, %v427
      %v435 = vadd.f32 %v415, %v427
      %v436 = vadd.f32 %v416, %v427
      %v437 = vadd.f32 %v417, %v427
      %v438 = vadd.f32 %v418, %v427
      %v439 = vadd.f32 %v419, %v427
      %v440 = vadd.f32 %v420, %v427
      %v441 = vadd.f32 %v421, %v427
      %v442 = vadd.f32 %v422, %v427
      %v443 = vadd.f32 %v423, %v427
      %v444 = vadd.f32 %v424, %v427
      %vm445 = vcmp.ge.f32.partialorder %v429, 0.0
      %vm446 = vcmp.ge.f32.partialorder %v430, 0.0
      %vm447 = vcmp.ge.f32.partialorder %v431, 0.0
      %vm448 = vcmp.ge.f32.partialorder %v432, 0.0
      %vm449 = vcmp.ge.f32.partialorder %v433, 0.0
      %vm450 = vcmp.ge.f32.partialorder %v434, 0.0
      %vm451 = vcmp.ge.f32.partialorder %v435, 0.0
      %vm452 = vcmp.ge.f32.partialorder %v436, 0.0
      %vm453 = vcmp.ge.f32.partialorder %v437, 0.0
      %vm454 = vcmp.ge.f32.partialorder %v438, 0.0
      %vm455 = vcmp.ge.f32.partialorder %v439, 0.0
      %vm456 = vcmp.ge.f32.partialorder %v440, 0.0
      %vm457 = vcmp.ge.f32.partialorder %v441, 0.0
      %vm458 = vcmp.ge.f32.partialorder %v442, 0.0
      %vm459 = vcmp.ge.f32.partialorder %v443, 0.0
      %vm460 = vcmp.ge.f32.partialorder %v444, 0.0
      %v461 = vmul.f32 %v429, 0.2
      %v462 = vmul.f32 %v430, 0.2
      %v463 = vmul.f32 %v431, 0.2
      %v464 = vmul.f32 %v432, 0.2
      %v465 = vmul.f32 %v433, 0.2
      %v466 = vmul.f32 %v434, 0.2
      %v467 = vmul.f32 %v435, 0.2
      %v468 = vmul.f32 %v436, 0.2
      %v469 = vmul.f32 %v437, 0.2
      %v470 = vmul.f32 %v438, 0.2
      %v471 = vmul.f32 %v439, 0.2
      %v472 = vmul.f32 %v440, 0.2
      %v473 = vmul.f32 %v441, 0.2
      %v474 = vmul.f32 %v442, 0.2
      %v475 = vmul.f32 %v443, 0.2
      %v476 = vmul.f32 %v444, 0.2
      %v477 = vsel %vm445, %v429, %v461
      %v478 = vsel %vm446, %v430, %v462
      %v479 = vsel %vm447, %v431, %v463
      %v480 = vsel %vm448, %v432, %v464
      %v481 = vsel %vm449, %v433, %v465
      %v482 = vsel %vm450, %v434, %v466
      %v483 = vsel %vm451, %v435, %v467
      %v484 = vsel %vm452, %v436, %v468
      %v485 = vsel %vm453, %v437, %v469
      %v486 = vsel %vm454, %v438, %v470
      %v487 = vsel %vm455, %v439, %v471
      %v488 = vsel %vm456, %v440, %v472
      %v489 = vsel %vm457, %v441, %v473
      %v490 = vsel %vm458, %v442, %v474
      %v491 = vsel %vm459, %v443, %v475
      %v492 = vsel %vm460, %v444, %v476
      %493 = vst [vmem:[#allocation3] sm:$0xff] %v477
      %494 = vst [vmem:[#allocation3 + $0x8] sm:$0xff] %v478
      %495 = vst [vmem:[#allocation3 + $0x10] sm:$0xff] %v479
      %496 = vst [vmem:[#allocation3 + $0x18] sm:$0xff] %v480
      %497 = vst [vmem:[#allocation3 + $0x20] sm:$0xff] %v481
      %498 = vst [vmem:[#allocation3 + $0x28] sm:$0xff] %v482
      %499 = vst [vmem:[#allocation3 + $0x30] sm:$0xff] %v483
      %500 = vst [vmem:[#allocation3 + $0x38] sm:$0xff] %v484
      %501 = vst [vmem:[#allocation3 + $0x40] sm:$0xff] %v485
      %502 = vst [vmem:[#allocation3 + $0x48] sm:$0xff] %v486
      %503 = vst [vmem:[#allocation3 + $0x50] sm:$0xff] %v487
      %504 = vst [vmem:[#allocation3 + $0x58] sm:$0xff] %v488
      %505 = vst [vmem:[#allocation3 + $0x60] sm:$0xff] %v489
      %506 = vst [vmem:[#allocation3 + $0x68] sm:$0xff] %v490
      %507 = vst [vmem:[#allocation3 + $0x70] sm:$0xff] %v491
      %508 = vst [vmem:[#allocation3 + $0x78] sm:$0xff] %v492
    $region25: #{tpu_custom_call.1} parent=1 // pred_fallthru
      _
    // Predicated region
    $region26: #{tpu_custom_call.1} parent=1 // pred_check
      _
    $region27: #{tpu_custom_call.1} parent=1 // pred_check_branch
      %510 = sbr.rel (0) target = $region29
    $region28: #{tpu_custom_call.1} parent=1 // pred_region
      %512 = vsyncadd [#allocation4], 0
      %s513 = sshll.u32 [#allocation3], 4
      %s514 = int_to_ptr.vmem [resolvable:$true] %s513
      %s515 = sshll.u32 %s4, 4
      %s516 = int_to_ptr.hbm [resolvable:$true] %s515
      %521 = dma.vmem_to_hbm [thread:$0]  %s514, 2048, %s516, [#allocation4], 128, 128, 8
    $region29: #{tpu_custom_call.1} parent=1 // pred_fallthru
      _
    // Predicated region
    $region30: #{tpu_custom_call.1} parent=1 // pred_check
      _
    $region31: #{tpu_custom_call.1} parent=1 // pred_check_branch
      %523 = sbr.rel (0) target = $region33
    $region32: #{tpu_custom_call.1} parent=1 // pred_region
      %525 = dma.done [#allocation4], 2048
    $region33: #{tpu_custom_call.1} parent=1 // pred_fallthru
      _
    %526 = vsyncpa [#allocation4], 1

</llo_original>
